<compile_context>
chip_gen: v7x
topology: tpu7x:2x2x1
jax: 0.10.0
libtpu: 0.0.40
codegen_flags: <defaults>
</compile_context>

<pallas_src>
import jax
import jax.numpy as jnp
from jax.experimental import pallas as pl
from jax.experimental.pallas import tpu as pltpu


def _round_up(x, m):
    return ((x + m - 1) // m) * m


def _choose_tile(batch, block_b):
    # Largest tile the budget allows: multiple of 128 (output is lane-major), capped
    # at 32K rows so the double-buffered lane-padded x tiles (~tb * 1 KiB in f32)
    # stay well under the 48 MiB VMEM limit requested below.
    cap = _round_up(max(128, min(int(block_b), 32768)), 128)
    if batch <= 1024:
        # Small batch: a single (possibly ragged) tile unless the caller forces less.
        return min(cap, _round_up(batch, 8))
    # Large batch: at least two grid steps so v7x's two TensorCores both get work.
    return min(cap, _round_up(-(-batch // 2), 128))


def critic_kernel(x_ref, w_in_ref, b_in_ref, w_v_ref, b_v_ref, out_ref):
    # hT[k, b] = sum_f W_in[k, f] * x[b, f]   (MXU, f32 accumulation, batch -> lanes)
    ht = jax.lax.dot_general(
        w_in_ref[...], x_ref[...],
        dimension_numbers=(((1,), (1,)), ((), ())),
        preferred_element_type=jnp.float32)                      # (H, tb)
    ht = jnp.maximum(ht + b_in_ref[...], 0.0)                    # bias + ReLU (VPU)

    # Width-1 value head: weight the H rows and reduce over sublanes -> lane-major.
    v = jnp.sum(ht * w_v_ref[...], axis=0) + b_v_ref[0, 0]       # (tb,), f32

    # Lane-dense output block: replicate across the 8 sublanes that the (8,128)-tiled
    # HBM layout pads to anyway; the wrapper reads row 0.
    out_ref[...] = jnp.broadcast_to(v, out_ref.shape)


def critic_forward(x, params, *, block_b=16384):
    """CriticNetwork forward. x: (B, input_size). Returns the value, shape (B, 1), f32."""
    (w_in, b_in, w_h0, b_h0, w_h1, b_h1, w_v, b_v) = params
    del w_h0, b_h0, w_h1, b_h1      # dead in the torch forward -> no compute, no DMA

    B, F = x.shape
    H, F_w = w_in.shape
    assert F_w == F, "w_in must be (hidden, input) = PyTorch nn.Linear layout"

    # Cast only the tiny matmul weight if x is already stored low-precision in HBM;
    # never re-stream x through HBM with a wrapper-side astype.
    w_in_m = w_in if w_in.dtype == x.dtype else w_in.astype(x.dtype)

    # Tiny parameter relayouts (a few KB of XLA work, outside the hot path):
    b_in_col = jnp.asarray(b_in, jnp.float32).reshape(H, 1)   # input bias as a column
    w_v_col = jnp.asarray(w_v, jnp.float32).reshape(H, 1)     # value weights as a column
    b_v_s = jnp.asarray(b_v, jnp.float32).reshape(1, 1)       # scalar -> SMEM

    tb = _choose_tile(B, block_b)
    nt = -(-B // tb)                 # ragged last tile; no jnp.pad of x
    out_cols = nt * tb

    itemsize = x.dtype.itemsize
    cost = pl.CostEstimate(
        flops=2 * out_cols * F * H + 4 * out_cols * H,
        transcendentals=0,
        bytes_accessed=(out_cols * F * itemsize            # x (dominant stream)
                        + H * F * itemsize + (2 * H + 1) * 4
                        + 8 * out_cols * 4),                # lane-dense output slab
    )

    out = pl.pallas_call(
        critic_kernel,
        out_shape=jax.ShapeDtypeStruct((8, out_cols), jnp.float32),
        grid=(nt,),
        in_specs=[
            pl.BlockSpec((tb, F), lambda i: (i, 0)),            # x: tiled over batch
            pl.BlockSpec((H, F), lambda i: (0, 0)),             # weights/biases stay
            pl.BlockSpec((H, 1), lambda i: (0, 0)),             #   VMEM-resident
            pl.BlockSpec((H, 1), lambda i: (0, 0)),             #   across grid steps
            pl.BlockSpec(memory_space=pltpu.MemorySpace.SMEM),  # b_v scalar in SMEM
        ],
        out_specs=pl.BlockSpec((8, tb), lambda i: (0, i)),
        compiler_params=pltpu.CompilerParams(
            dimension_semantics=("parallel",),                  # shard tiles over TCs
            vmem_limit_bytes=48 * 1024 * 1024,                  # > v5e 16 MiB default,
        ),                                                      # < v7x 64 MiB physical
        cost_estimate=cost,
    )(x, w_in_m, b_in_col, w_v_col, b_v_s)

    # Back to the module contract (B, 1); garbage columns from the ragged tail of the
    # last tile (if any) are dropped here.
    return out[0, :B].reshape(B, 1)


def init_params(key, input_size, hidden_size):
    """Synthetic init in PyTorch nn.Linear layout: weight (out, in), bias (out,)."""
    ks = jax.random.split(key, 8)

    def lin(kw, kb, fan_in, fan_out):
        bound = 1.0 / (fan_in ** 0.5)
        w = jax.random.uniform(kw, (fan_out, fan_in), jnp.float32, -bound, bound)
        b = jax.random.uniform(kb, (fan_out,), jnp.float32, -bound, bound)
        return w, b

    w_in, b_in = lin(ks[0], ks[1], input_size, hidden_size)
    w_h0, b_h0 = lin(ks[2], ks[3], hidden_size, hidden_size)   # dead in forward
    w_h1, b_h1 = lin(ks[4], ks[5], hidden_size, hidden_size)   # dead in forward
    w_v, b_v = lin(ks[6], ks[7], hidden_size, 1)
    return (w_in, b_in, w_h0, b_h0, w_h1, b_h1, w_v, b_v)


def critic_forward_ref(x, params):
    (w_in, b_in, w_h0, b_h0, w_h1, b_h1, w_v, b_v) = params
    h = jnp.maximum(x.astype(jnp.float32) @ w_in.T + b_in, 0.0)
    # value_hidden_0/1 are dead in the torch forward; the output is value(h).
    return jnp.sum(h * w_v, axis=-1, keepdims=True) + b_v


if __name__ == "__main__":
    input_size, hidden_size = 16, 32
    key = jax.random.PRNGKey(0)
    kx, kb, kc, kp = jax.random.split(key, 4)
    params = init_params(kp, input_size, hidden_size)

    # Tiny batch: a single tile, blocks equal to the full arrays.
    x_small = jax.random.normal(kx, (8, input_size), dtype=jnp.float32)
    out_small = jax.block_until_ready(critic_forward(x_small, params))
    ref_small = critic_forward_ref(x_small, params)
    assert out_small.shape == (8, 1)
    assert jnp.allclose(out_small, ref_small, atol=1e-4, rtol=1e-4)

    # Forced small tile: multi-step grid (tb=384, grid=3) with a ragged last tile ->
    # exercises the no-pad path and the lane-dense blocked output.
    x_big = jax.random.normal(kb, (1000, input_size), dtype=jnp.float32)
    ref_big = critic_forward_ref(x_big, params)
    out_big = jax.block_until_ready(critic_forward(x_big, params, block_b=384))
    assert out_big.shape == (1000, 1)
    assert jnp.allclose(out_big, ref_big, atol=1e-4, rtol=1e-4)

    # Default (large-tile) config on the same data: single 1000-row tile.
    out_def = jax.block_until_ready(critic_forward(x_big, params))
    assert jnp.allclose(out_def, ref_big, atol=1e-4, rtol=1e-4)

    # Batch > 1024 with the default tile budget: two grid steps (v7x dual-TC path),
    # ragged last tile.
    x_mid = jax.random.normal(kc, (3000, input_size), dtype=jnp.float32)
    out_mid = jax.block_until_ready(critic_forward(x_mid, params))
    ref_mid = critic_forward_ref(x_mid, params)
    assert out_mid.shape == (3000, 1)
    assert jnp.allclose(out_mid, ref_mid, atol=1e-4, rtol=1e-4)

    # x already stored in bf16 in HBM: only the tiny weights are cast, x is not
    # re-streamed; accumulation stays f32.
    out_bf16 = jax.block_until_ready(critic_forward(x_big.astype(jnp.bfloat16), params))
    assert out_bf16.shape == (1000, 1)
    assert jnp.allclose(out_bf16, ref_big, atol=5e-2, rtol=5e-2)

    print("KERNEL_OK")
</pallas_src>

<mosaic_0001>
module attributes {stable_mosaic.version = 11 : i64} {
  func.func @critic_kernel(%arg0: i32, %arg1: memref<8x16xf32, #tpu.memory_space<vmem>>, %arg2: memref<32x16xf32, #tpu.memory_space<vmem>>, %arg3: memref<32x1xf32, #tpu.memory_space<vmem>>, %arg4: memref<32x1xf32, #tpu.memory_space<vmem>>, %arg5: memref<1x1xf32, #tpu.memory_space<smem>>, %arg6: memref<8x8xf32, #tpu.memory_space<vmem>>) attributes {dimension_semantics = [#tpu.dimension_semantics<parallel>], iteration_bounds = array<i64: 1>, scalar_prefetch = 0 : i64, scratch_operands = 0 : i64, tpu.core_type = #tpu.core_type<tc>, window_params = [{transform_indices = @transform_0, window_bounds = array<i64: 8, 16>}, {pipeline_mode = #tpu.pipeline_mode<synchronous>, transform_indices = @transform_1, window_bounds = array<i64: 32, 16>}, {pipeline_mode = #tpu.pipeline_mode<synchronous>, transform_indices = @transform_2, window_bounds = array<i64: 32, 1>}, {pipeline_mode = #tpu.pipeline_mode<synchronous>, transform_indices = @transform_3, window_bounds = array<i64: 32, 1>}, {transform_indices = @transform_4, window_bounds = array<i64: 1, 1>}, {transform_indices = @transform_5, window_bounds = array<i64: 8, 8>}]} {
    %c0 = arith.constant 0 : index
    %c0_0 = arith.constant 0 : index
    %0 = vector.load %arg2[%c0, %c0_0] : memref<32x16xf32, #tpu.memory_space<vmem>>, vector<32x16xf32>
    %c0_1 = arith.constant 0 : index
    %c0_2 = arith.constant 0 : index
    %1 = vector.load %arg1[%c0_1, %c0_2] : memref<8x16xf32, #tpu.memory_space<vmem>>, vector<8x16xf32>
    %cst = arith.constant dense<0.000000e+00> : vector<32x8xf32>
    %2 = tpu.matmul %0, %1, %cst {dimension_numbers = #tpu.dot_dimension_numbers<[1], [1], [0], [0], [0, 0, 1, 0], [], []>} : vector<32x16xf32>, vector<8x16xf32>, vector<32x8xf32> -> vector<32x8xf32>
    %c0_3 = arith.constant 0 : index
    %c0_4 = arith.constant 0 : index
    %3 = vector.load %arg3[%c0_3, %c0_4] : memref<32x1xf32, #tpu.memory_space<vmem>>, vector<32x1xf32>
    %4 = vector.broadcast %3 : vector<32x1xf32> to vector<32x8xf32>
    %5 = arith.addf %2, %4 : vector<32x8xf32>
    %cst_5 = arith.constant 0.000000e+00 : f32
    %6 = vector.broadcast %cst_5 : f32 to vector<32x8xf32>
    %7 = arith.maximumf %5, %6 : vector<32x8xf32>
    %c0_6 = arith.constant 0 : index
    %c0_7 = arith.constant 0 : index
    %8 = vector.load %arg4[%c0_6, %c0_7] : memref<32x1xf32, #tpu.memory_space<vmem>>, vector<32x1xf32>
    %9 = vector.broadcast %8 : vector<32x1xf32> to vector<32x8xf32>
    %10 = arith.mulf %7, %9 : vector<32x8xf32>
    %cst_8 = arith.constant dense<0.000000e+00> : vector<8xf32>
    %11 = vector.multi_reduction <add>, %10, %cst_8 [0] : vector<32x8xf32> to vector<8xf32>
    %c0_9 = arith.constant 0 : index
    %c0_10 = arith.constant 0 : index
    %12 = memref.load %arg5[%c0_9, %c0_10] : memref<1x1xf32, #tpu.memory_space<smem>>
    %13 = vector.broadcast %12 : f32 to vector<8xf32>
    %14 = arith.addf %11, %13 : vector<8xf32>
    %15 = vector.shape_cast %14 : vector<8xf32> to vector<1x8xf32>
    %16 = vector.broadcast %15 : vector<1x8xf32> to vector<8x8xf32>
    %c0_11 = arith.constant 0 : index
    %c0_12 = arith.constant 0 : index
    %17 = vector.load %arg6[%c0_11, %c0_12] : memref<8x8xf32, #tpu.memory_space<vmem>>, vector<8x8xf32>
    tpu.vector_store %arg6[%c0_11, %c0_12], %16 {strides = array<i32>} : memref<8x8xf32, #tpu.memory_space<vmem>>, vector<8x8xf32>,
    return
  }
  func.func @transform_0(%arg0: i32) -> (i32, i32) {
    %c0_i32 = arith.constant 0 : i32
    %c0_i32_0 = arith.constant 0 : i32
    return %arg0, %c0_i32 : i32, i32
  }
  func.func @transform_1(%arg0: i32) -> (i32, i32) {
    %c0_i32 = arith.constant 0 : i32
    %c0_i32_0 = arith.constant 0 : i32
    %c0_i32_1 = arith.constant 0 : i32
    return %c0_i32, %c0_i32_0 : i32, i32
  }
  func.func @transform_2(%arg0: i32) -> (i32, i32) {
    %c0_i32 = arith.constant 0 : i32
    %c0_i32_0 = arith.constant 0 : i32
    %c0_i32_1 = arith.constant 0 : i32
    return %c0_i32, %c0_i32_0 : i32, i32
  }
  func.func @transform_3(%arg0: i32) -> (i32, i32) {
    %c0_i32 = arith.constant 0 : i32
    %c0_i32_0 = arith.constant 0 : i32
    %c0_i32_1 = arith.constant 0 : i32
    return %c0_i32, %c0_i32_0 : i32, i32
  }
  func.func @transform_4(%arg0: i32) -> (i32, i32) {
    %c0_i32 = arith.constant 0 : i32
    %c0_i32_0 = arith.constant 0 : i32
    %c0_i32_1 = arith.constant 0 : i32
    return %c0_i32, %c0_i32_0 : i32, i32
  }
  func.func @transform_5(%arg0: i32) -> (i32, i32) {
    %c0_i32 = arith.constant 0 : i32
    %c0_i32_0 = arith.constant 0 : i32
    return %c0_i32, %arg0 : i32, i32
  }
}

</mosaic_0001>

<llo_original>
// kernel: tpu_custom_call.1
$region0: #{tpu_custom_call.1}
  #allocation0 [shape = 'u32[]', space=smem, size = 0x4, offset = 0x4, fixed_abs, tag = 'smem constant byte address 0x4 - core index']
  #allocation1 [shape = 'u32[144,128]{1,0:T(1,128)}', space=vmem, size = 0x12000, scoped, tag = 'internal scratch']
  #allocation2 [shape = 'f32[1,1]{1,0:T(1,128)S(6)}', space=smem, size = 0x200, scoped, tag = 'scoped memory for tpu_custom_call.1']
  %s0 = inlined_call_operand.vmem [shape: f32[8,16], index: 0, kind: input, shape index: {}]
  %s1 = inlined_call_operand.vmem [shape: f32[32,16], index: 1, kind: input, shape index: {}]
  %s2 = inlined_call_operand.vmem [shape: f32[32,1], index: 2, kind: input, shape index: {}]
  %s3 = inlined_call_operand.vmem [shape: f32[32,1], index: 3, kind: input, shape index: {}]
  %s4 = inlined_call_operand.<no memory space> [shape: f32[1,1], index: 4, kind: input, shape index: {}]
  %s5 = inlined_call_operand.hbm [shape: f32[8,8], index: 5, kind: output, shape index: {}]
  %s6 = sld [smem:[#allocation0]]
  $region30: #{tpu_custom_call.1} parent=0
    _
  %s8 = ssub.s32 1, %s6
  %s9 = scalar_select 0, %s8, %s6
  %10 = sst [smem:[#allocation2]] %s4
  $region1: #{tpu_custom_call.1} parent=0
    #allocation3 [shape = 'u8[4096]{0}', space=vmem, size = 0x1000, scoped, tag = 'output window, operand 0, single buffered']
    #allocation4 [shape = 's32[1]{0}', space=sflag, size = 0x4, scoped, tag = 'scoped memory for tpu_custom_call.1']
    %11 = vsyncpa [#allocation4], 0
    // Predicated region
    $region2: #{tpu_custom_call.1} parent=1 // pred_check
      _
    $region3: #{tpu_custom_call.1} parent=1 // pred_check_branch
      %13 = sbr.rel (0) target = $region5
    $region4: #{tpu_custom_call.1} parent=1 // pred_region
      _
    $region5: #{tpu_custom_call.1} parent=1 // pred_fallthru
      _
    // Predicated region
    $region6: #{tpu_custom_call.1} parent=1 // pred_check
      _
    $region7: #{tpu_custom_call.1} parent=1 // pred_check_branch
      %15 = sbr.rel (0) target = $region9
    $region8: #{tpu_custom_call.1} parent=1 // pred_region
      _
    $region9: #{tpu_custom_call.1} parent=1 // pred_fallthru
      _
    // Predicated region
    $region10: #{tpu_custom_call.1} parent=1 // pred_check
      _
    $region11: #{tpu_custom_call.1} parent=1 // pred_check_branch
      %17 = sbr.rel (0) target = $region13
    $region12: #{tpu_custom_call.1} parent=1 // pred_region
      _
    $region13: #{tpu_custom_call.1} parent=1 // pred_fallthru
      _
    // Predicated region
    $region14: #{tpu_custom_call.1} parent=1 // pred_check
      _
    $region15: #{tpu_custom_call.1} parent=1 // pred_check_branch
      %19 = sbr.rel (0) target = $region17
    $region16: #{tpu_custom_call.1} parent=1 // pred_region
      _
    $region17: #{tpu_custom_call.1} parent=1 // pred_fallthru
      _
    // Predicated region
    $region18: #{tpu_custom_call.1} parent=1 // pred_check
      _
    $region19: #{tpu_custom_call.1} parent=1 // pred_check_branch
      %21 = sbr.rel (0) target = $region21
    $region20: #{tpu_custom_call.1} parent=1 // pred_region
      _
    $region21: #{tpu_custom_call.1} parent=1 // pred_fallthru
      _
    %v22 = vld [vmem:[%s1] sm:$0xff]
    %v23 = vld [vmem:[%s1 + $0x8] sm:$0xff]
    %v24 = vld [vmem:[%s1 + $0x10] sm:$0xff]
    %v25 = vld [vmem:[%s1 + $0x18] sm:$0xff]
    %v26 = vld [vmem:[%s0] sm:$0xff]
    %v27 = vld [vmem:[%s2] sm:$0xff]
    %v28 = vld [vmem:[%s2 + $0x8] sm:$0xff]
    %v29 = vld [vmem:[%s2 + $0x10] sm:$0xff]
    %v30 = vld [vmem:[%s2 + $0x18] sm:$0xff]
    %32 = vset.pattern.permute.xlu0 0
    %33 = vperm.xlu0 %32, %v27
    %v34 = vpop.permute.xlu0 %33
    %37 = vset.pattern.permute.xlu0 0
    %38 = vperm.xlu0 %37, %v28
    %v39 = vpop.permute.xlu0 %38
    %42 = vset.pattern.permute.xlu0 0
    %43 = vperm.xlu0 %42, %v29
    %v44 = vpop.permute.xlu0 %43
    %47 = vset.pattern.permute.xlu0 0
    %48 = vperm.xlu0 %47, %v30
    %v49 = vpop.permute.xlu0 %48
    %vm51 = vcmask 130048
    %v53 = vsel %vm51, %v22, 0
    %v56 = vsel %vm51, %v23, 0
    %v59 = vsel %vm51, %v24, 0
    %v62 = vsel %vm51, %v25, 0
    %v65 = vsel %vm51, %v26, 0
    %67 = vmatprep.subr.mxu0 0.0
    %68 = vmatpush1.xpose.msra.mxu0 %v65
    %69 = vmatprep.subr.mxu0 0.0
    %70 = vmatpush1.xpose.msra.mxu0 0.0
    %71 = vmatprep.subr.mxu0 0.0
    %72 = vmatpush1.xpose.msra.mxu0 0.0
    %73 = vmatprep.subr.mxu0 0.0
    %74 = vmatpush1.xpose.msra.mxu0 0.0
    %75 = vmatprep.subr.mxu0 0.0
    %76 = vmatpush1.xpose.msra.mxu0 0.0
    %77 = vmatprep.subr.mxu0 0.0
    %78 = vmatpush1.xpose.msra.mxu0 0.0
    %79 = vmatprep.subr.mxu0 0.0
    %80 = vmatpush1.xpose.msra.mxu0 0.0
    %81 = vmatprep.subr.mxu0 0.0
    %82 = vmatpush1.xpose.msra.mxu0 0.0
    %83 = vmatprep.subr.mxu0 0.0
    %84 = vmatpush1.xpose.msra.mxu0 0.0
    %85 = vmatprep.subr.mxu0 0.0
    %86 = vmatpush1.xpose.msra.mxu0 0.0
    %87 = vmatprep.subr.mxu0 0.0
    %88 = vmatpush1.xpose.msra.mxu0 0.0
    %89 = vmatprep.subr.mxu0 0.0
    %90 = vmatpush1.xpose.msra.mxu0 0.0
    %91 = vmatprep.subr.mxu0 0.0
    %92 = vmatpush1.xpose.msra.mxu0 0.0
    %93 = vmatprep.subr.mxu0 0.0
    %94 = vmatpush1.xpose.msra.mxu0 0.0
    %95 = vmatprep.subr.mxu0 0.0
    %96 = vmatpush1.xpose.msra.mxu0 0.0
    %97 = vmatprep.subr.mxu0 0.0
    %98 = vmatpush1.xpose.msra.mxu0 0.0
    %99 = vmatprep.subr.mxu0 0.0
    %100 = vmatpush1.xpose.msra.mxu0 0.0
    %101 = vmatprep.subr.mxu0 0.0
    %102 = vmatpush1.xpose.msra.mxu0 0.0
    %103 = vmatprep.subr.mxu0 0.0
    %104 = vmatpush1.xpose.msra.mxu0 0.0
    %105 = vmatprep.subr.mxu0 0.0
    %106 = vmatpush1.xpose.msra.mxu0 0.0
    %107 = vmatprep.subr.mxu0 0.0
    %108 = vmatpush1.xpose.msra.mxu0 0.0
    %109 = vmatprep.subr.mxu0 0.0
    %110 = vmatpush1.xpose.msra.mxu0 0.0
    %111 = vmatprep.subr.mxu0 0.0
    %112 = vmatpush1.xpose.msra.mxu0 0.0
    %113 = vmatprep.subr.mxu0 0.0
    %114 = vmatpush1.xpose.msra.mxu0 0.0
    %115 = vmatprep.subr.mxu0 0.0
    %116 = vmatpush1.xpose.msra.mxu0 0.0
    %117 = vmatprep.subr.mxu0 0.0
    %118 = vmatpush1.xpose.msra.mxu0 0.0
    %119 = vmatprep.subr.mxu0 0.0
    %120 = vmatpush1.xpose.msra.mxu0 0.0
    %121 = vmatprep.subr.mxu0 0.0
    %122 = vmatpush1.xpose.msra.mxu0 0.0
    %123 = vmatprep.subr.mxu0 0.0
    %124 = vmatpush1.xpose.msra.mxu0 0.0
    %125 = vmatprep.subr.mxu0 0.0
    %126 = vmatpush1.xpose.msra.mxu0 0.0
    %127 = vmatprep.subr.mxu0 0.0
    %128 = vmatpush1.xpose.msra.mxu0 0.0
    %129 = vmatprep.subr.mxu0 0.0
    %130 = vmatpush1.xpose.msra.mxu0 0.0
    %131 = vmatprep.mubr.f32.mxu0 0.0
    %132 = vmatmul.mubr.f32.gmra.mrb[0].mxu0 %v53
    %v133 = vpop.f32.mrb[0].mxu0
    %v134 = vadd.f32 %v34, %v133
    %v135 = vpop.f32.mrb[0].mxu0
    %136 = vmatprep.mubr.f32.mxu0 0.0
    %137 = vmatmul.mubr.f32.gmra.mrb[0].mxu0 %v56
    %v138 = vpop.f32.mrb[0].mxu0
    %v139 = vadd.f32 %v39, %v138
    %v140 = vpop.f32.mrb[0].mxu0
    %141 = vmatprep.mubr.f32.mxu0 0.0
    %142 = vmatmul.mubr.f32.gmra.mrb[0].mxu0 %v59
    %v143 = vpop.f32.mrb[0].mxu0
    %v144 = vadd.f32 %v44, %v143
    %v145 = vpop.f32.mrb[0].mxu0
    %146 = vmatprep.mubr.f32.mxu0 0.0
    %147 = vmatmul.mubr.f32.gmra.mrb[0].mxu0 %v62
    %v148 = vpop.f32.mrb[0].mxu0
    %v149 = vadd.f32 %v49, %v148
    %v150 = vpop.f32.mrb[0].mxu0
    %151 = vdwg.mxu0
    %v152 = vmax.f32 %v134, 0.0
    %v153 = vmax.f32 %v139, 0.0
    %v154 = vmax.f32 %v144, 0.0
    %v155 = vmax.f32 %v149, 0.0
    %v156 = vld [vmem:[%s3] sm:$0xff]
    %v157 = vld [vmem:[%s3 + $0x8] sm:$0xff]
    %v158 = vld [vmem:[%s3 + $0x10] sm:$0xff]
    %v159 = vld [vmem:[%s3 + $0x18] sm:$0xff]
    %161 = vset.pattern.permute.xlu0 0
    %162 = vperm.xlu0 %161, %v156
    %v163 = vpop.permute.xlu0 %162
    %166 = vset.pattern.permute.xlu0 0
    %167 = vperm.xlu0 %166, %v157
    %v168 = vpop.permute.xlu0 %167
    %171 = vset.pattern.permute.xlu0 0
    %172 = vperm.xlu0 %171, %v158
    %v173 = vpop.permute.xlu0 %172
    %176 = vset.pattern.permute.xlu0 0
    %177 = vperm.xlu0 %176, %v159
    %v178 = vpop.permute.xlu0 %177
    %v180 = vmul.f32 %v152, %v163
    %v181 = vmul.f32 %v153, %v168
    %v182 = vmul.f32 %v154, %v173
    %v183 = vmul.f32 %v155, %v178
    %vm184 = vcmask 64512
    %v185 = vsel %vm184, %v180, 0.0
    %v186 = vsel %vm184, %v181, 0.0
    %v187 = vadd.f32 %v185, %v186
    %v188 = vsel %vm184, %v182, 0.0
    %v189 = vadd.f32 %v187, %v188
    %v190 = vsel %vm184, %v183, 0.0
    %v191 = vadd.f32 %v189, %v190
    %v192 = vrot.slane %v191, 4
    %v193 = vadd.f32 %v191, %v192
    %v194 = vrot.slane %v193, 2
    %v195 = vadd.f32 %v193, %v194
    %v196 = vrot.slane %v195, 1
    %v197 = vadd.f32 %v195, %v196
    %s198 = sld [smem:[#allocation2]]
    %v199 = vstv %s198
    %v200 = vadd.f32 %v197, %v199
    %201 = vst.msk [vmem:[#allocation3] sm:$0xff] %vm184, %v200
    // Predicated region
    $region22: #{tpu_custom_call.1} parent=1 // pred_check
      _
    $region23: #{tpu_custom_call.1} parent=1 // pred_check_branch
      %203 = sbr.rel (0) target = $region25
    $region24: #{tpu_custom_call.1} parent=1 // pred_region
      %s205 = ssub.s32 128, 128
      %206 = vsyncadd [#allocation4], %s205
      %s208 = sshll.u32 [#allocation3], 4
      %s209 = int_to_ptr.vmem [resolvable:$true] %s208
      %211 = dma.vmem_to_hbm [thread:$0]  %s209, 128, %s5, [#allocation4]
    $region25: #{tpu_custom_call.1} parent=1 // pred_fallthru
      _
    // Predicated region
    $region26: #{tpu_custom_call.1} parent=1 // pred_check
      _
    $region27: #{tpu_custom_call.1} parent=1 // pred_check_branch
      %213 = sbr.rel (0) target = $region29
    $region28: #{tpu_custom_call.1} parent=1 // pred_region
      %214 = dma.done [#allocation4], 128
    $region29: #{tpu_custom_call.1} parent=1 // pred_fallthru
      _
    %215 = vsyncpa [#allocation4], 1

</llo_original>
